<compile_context>
chip_gen: v5e
topology: v5e:2x2
jax: 0.10.0
libtpu: 0.0.40
codegen_flags: <defaults>
</compile_context>

<pallas_src>
import re

import numpy as np
import jax
import jax.numpy as jnp
from jax import lax
from jax.experimental import pallas as pl
from jax.experimental.pallas import tpu as pltpu


# ----------------------------------------------------------------------------
# Pallas kernel: fused threshold (Attr > 0.8) + per-row bit-pack into int32
# ----------------------------------------------------------------------------
def _threshold_pack_kernel(attr_ref, out_ref):
    # In-kernel cast (no-op for f32 inputs; needed on v5e for bf16 — fused with
    # the compare instead of a separate wrapper-side XLA pass).
    vals = attr_ref[...].astype(jnp.float32)                      # (TM, c)
    mask = (vals > jnp.float32(0.8)).astype(jnp.int32)            # (TM, c) {0,1}
    lane = lax.broadcasted_iota(jnp.int32, mask.shape, dimension=1)
    weights = jnp.left_shift(jnp.int32(1), lane)                  # bit k per channel
    # Bits are distinct, so sum == bitwise OR.  Lane reduce runs on the XLU.
    out_ref[...] = jnp.sum(mask * weights, axis=1, keepdims=True)  # (TM, 1) int32


def attr_threshold_bits(attr: jax.Array, row_tile: int = 512) -> jax.Array:
    """Returns an int32 (bs, 1) array; bit k of row i == (attr[i, k] > 0.8)."""
    bs, c = attr.shape
    assert c <= 32, "bit-packed mask supports up to 32 attribute channels"
    # Row tile: whole batch if small, else 512-row tiles (64 KiB/tile for c=32,
    # far under the 32 MiB scoped / 64 MiB physical VMEM on v7x).
    tm = bs if bs <= row_tile else row_tile
    grid = (pl.cdiv(bs, tm),)
    return pl.pallas_call(
        _threshold_pack_kernel,
        out_shape=jax.ShapeDtypeStruct((bs, 1), jnp.int32),
        grid=grid,
        in_specs=[pl.BlockSpec((tm, c), lambda i: (i, 0))],
        out_specs=pl.BlockSpec((tm, 1), lambda i: (i, 0)),
        compiler_params=pltpu.CompilerParams(
            dimension_semantics=("parallel",)),
    )(attr)


# ----------------------------------------------------------------------------
# Host-side text assembly (verbatim port of the PyTorch module's string logic)
# ----------------------------------------------------------------------------
def remove_specific_duplicate_words(text, words_to_process):
    pattern = '\\b(?:' + '|'.join((re.escape(word) for word in words_to_process)) + ')\\b'
    parts = re.findall('\\w+|[^\\w\\s]', text)
    occurrences = {}
    for i, part in enumerate(parts):
        if re.match(pattern, part):
            if part not in occurrences:
                occurrences[part] = []
            occurrences[part].append(i)
    single_occurrences = {word for word, indices in occurrences.items() if len(indices) == 1}
    result = []
    for i, part in enumerate(parts):
        if part in occurrences:
            if part in single_occurrences:
                continue
            if occurrences[part][-1] == i:
                result.append(part)
        else:
            result.append(part)
    result_text = ''.join((' ' + part if re.match('\\w+', part) and i != 0 and re.match('\\w+', result[i - 1]) else part
                           for i, part in enumerate(result)))
    result_text = re.sub('[^\\w\\s](?=[^\\w\\s]*$)', '.', result_text)
    return result_text


class AttrSelect:
    """JAX/Pallas equivalent of the PyTorch Attr_select module."""

    def __init__(self, num_query=20):
        self.num_query = num_query  # unused in forward (kept for parity)

    def __call__(self, attr: jax.Array):
        bs, c = attr.shape
        # Device compute: fused threshold + bit-pack (bs*4 bytes D2H instead of
        # bs*c*4).  Single blocking host fetch (device_get) — no double sync.
        packed = attr_threshold_bits(attr)
        packed_host = np.asarray(jax.device_get(packed)).reshape(bs)
        packed_u = packed_host.astype(np.int64) & 0xFFFFFFFF       # unsigned view
        valid_probs = ((packed_u[:, None] >> np.arange(c)) & 1).astype(bool)

        text_list = []
        text1 = 'A photo of'
        for i in range(bs):
            # TODO(synk): string construction has no Pallas equivalent; done on host.
            if valid_probs[i][22] == False:  # noqa: E712 (mirror PyTorch exactly)
                text2 = ' a man '
            elif valid_probs[i][22] == True:  # noqa: E712
                text2 = ' a woman '
            else:
                text2 = ' a person '
            if valid_probs[i][15] or valid_probs[i][16] or valid_probs[i][17]:
                if valid_probs[i][15] == True:  # noqa: E712
                    text3 = 'while carrying a handbag.'
                elif valid_probs[i][16] == True:  # noqa: E712
                    text3 = 'while carrying a shoulder bag.'
                elif valid_probs[i][17] == True:  # noqa: E712
                    text3 = 'while carrying a backpack.'
                else:
                    text3 = ''
            else:
                text3 = ''
            text4 = 'and a hat,' if valid_probs[i][0] else ''
            text5 = 'and a pair of glasses,' if valid_probs[i][1] else ''
            text6 = 'and a short sleeved top,' if valid_probs[i][2] == True else ''   # noqa: E712
            text7 = 'and a long sleeved top,' if valid_probs[i][3] == True else ''    # noqa: E712
            text8 = 'and a long coat,' if valid_probs[i][10] == True else ''          # noqa: E712
            text9 = 'and a trousers,' if valid_probs[i][11] == True else ''           # noqa: E712
            text10 = 'and a shorts,' if valid_probs[i][12] == True else ''            # noqa: E712
            text11 = 'and a skirt,' if valid_probs[i][13] == True else ''             # noqa: E712
            if (valid_probs[i][2] or valid_probs[i][3] or valid_probs[i][10] or
                    valid_probs[i][11] or valid_probs[i][12] or valid_probs[i][13]):
                text678 = 'wearing ' + text4 + text5 + text6 + text7 + text8 + text9 + text10 + text11
            else:
                text678 = ''
            text0 = text1 + text2 + text678 + text3
            text0 = remove_specific_duplicate_words(text0, ['and'])
            text_list.append({'text': text0})
        return text_list


# ----------------------------------------------------------------------------
# Main
# ----------------------------------------------------------------------------
if __name__ == "__main__":
    key = jax.random.PRNGKey(0)
    bs, c = 2, 32  # needs c >= 23 so attribute index 22 exists
    attr = jax.random.uniform(key, (bs, c), dtype=jnp.float32)

    # Run the Pallas kernel once and block on the result.
    packed = attr_threshold_bits(attr)
    jax.block_until_ready(packed)

    # Sanity check the packed mask against a plain jnp reference.
    ref_mask = np.asarray(jax.device_get(attr > 0.8))
    got_u = (np.asarray(jax.device_get(packed)).reshape(bs).astype(np.int64) & 0xFFFFFFFF)
    got_mask = ((got_u[:, None] >> np.arange(c)) & 1).astype(bool)
    assert np.array_equal(ref_mask, got_mask), "bit-packed mask mismatch"

    # Full module forward (kernel + host-side text assembly).
    module = AttrSelect(num_query=20)
    text_list = module(attr)
    assert len(text_list) == bs and all('text' in d for d in text_list)

    print("KERNEL_OK")
</pallas_src>

<mosaic_0001>
module attributes {stable_mosaic.version = 11 : i64} {
  func.func @_threshold_pack_kernel(%arg0: i32, %arg1: memref<2x32xf32, #tpu.memory_space<vmem>>, %arg2: memref<2x1xi32, #tpu.memory_space<vmem>>) attributes {dimension_semantics = [#tpu.dimension_semantics<parallel>], iteration_bounds = array<i64: 1>, scalar_prefetch = 0 : i64, scratch_operands = 0 : i64, tpu.core_type = #tpu.core_type<tc>, window_params = [{transform_indices = @transform_0, window_bounds = array<i64: 2, 32>}, {transform_indices = @transform_1, window_bounds = array<i64: 2, 1>}]} {
    %c0 = arith.constant 0 : index
    %c0_0 = arith.constant 0 : index
    %0 = vector.load %arg1[%c0, %c0_0] : memref<2x32xf32, #tpu.memory_space<vmem>>, vector<2x32xf32>
    %cst = arith.constant 8.000000e-01 : f32
    %1 = vector.broadcast %cst : f32 to vector<2x32xf32>
    %2 = arith.cmpf ogt, %0, %1 : vector<2x32xf32>
    %3 = arith.extui %2 : vector<2x32xi1> to vector<2x32xi32>
    %4 = tpu.iota {dimensions = array<i32: 1>} : vector<2x32xi32>
    %c1_i32 = arith.constant 1 : i32
    %5 = vector.broadcast %c1_i32 : i32 to vector<2x32xi32>
    %6 = arith.shli %5, %4 : vector<2x32xi32>
    %7 = arith.muli %3, %6 : vector<2x32xi32>
    %cst_1 = arith.constant dense<0> : vector<2xi32>
    %8 = vector.multi_reduction <add>, %7, %cst_1 [1] : vector<2x32xi32> to vector<2xi32>
    %9 = vector.shape_cast %8 : vector<2xi32> to vector<2x1xi32>
    %c0_2 = arith.constant 0 : index
    %c0_3 = arith.constant 0 : index
    %10 = vector.load %arg2[%c0_2, %c0_3] : memref<2x1xi32, #tpu.memory_space<vmem>>, vector<2x1xi32>
    tpu.vector_store %arg2[%c0_2, %c0_3], %9 {strides = array<i32>} : memref<2x1xi32, #tpu.memory_space<vmem>>, vector<2x1xi32>,
    return
  }
  func.func @transform_0(%arg0: i32) -> (i32, i32) {
    %c0_i32 = arith.constant 0 : i32
    %c0_i32_0 = arith.constant 0 : i32
    return %arg0, %c0_i32 : i32, i32
  }
  func.func @transform_1(%arg0: i32) -> (i32, i32) {
    %c0_i32 = arith.constant 0 : i32
    %c0_i32_0 = arith.constant 0 : i32
    return %arg0, %c0_i32 : i32, i32
  }
}

</mosaic_0001>

<llo_original>
// kernel: tpu_custom_call.1
$region0: #{tpu_custom_call.1}
  #allocation0 [shape = 'u32[]', space=smem, size = 0x4, offset = 0x4, fixed_abs, tag = 'smem constant byte address 0x4 - core index']
  #allocation1 [shape = 'u32[72,128]{1,0:T(1,128)}', space=vmem, size = 0x9000, scoped, tag = 'internal scratch']
  %s0 = inlined_call_operand.hbm [shape: f32[2,32], index: 0, kind: input, shape index: {}]
  %s1 = inlined_call_operand.vmem [shape: s32[2,1], index: 1, kind: output, shape index: {}]
  %s2 = sld [smem:[#allocation0]]
  $region18: #{tpu_custom_call.1} parent=0
    _
  %s4 = ssub.s32 1, %s2
  %s5 = scalar_select 0, %s4, %s2
  $region1: #{tpu_custom_call.1} parent=0
    #allocation2 [shape = 'u8[1024]{0}', space=vmem, size = 0x400, scoped, tag = 'input window, operand 0, single buffered']
    #allocation3 [shape = 's32[1]{0}', space=sflag, size = 0x4, scoped, tag = 'scoped memory for tpu_custom_call.1']
    %6 = vsyncpa [#allocation3], 0
    // Predicated region
    $region2: #{tpu_custom_call.1} parent=1 // pred_check
      _
    $region3: #{tpu_custom_call.1} parent=1 // pred_check_branch
      %8 = sbr.rel (0) target = $region5
    $region4: #{tpu_custom_call.1} parent=1 // pred_region
      %10 = vsyncadd [#allocation3], 0
      %s12 = sshll.u32 %s0, 4
      %s13 = int_to_ptr.hbm [resolvable:$true] %s12
      %s14 = sshll.u32 [#allocation2], 4
      %s15 = int_to_ptr.vmem [resolvable:$true] %s14
      %17 = dma.hbm_to_vmem [thread:$0]  %s13, 32, %s15, [#allocation3]
    $region5: #{tpu_custom_call.1} parent=1 // pred_fallthru
      _
    // Predicated region
    $region6: #{tpu_custom_call.1} parent=1 // pred_check
      _
    $region7: #{tpu_custom_call.1} parent=1 // pred_check_branch
      %19 = sbr.rel (0) target = $region9
    $region8: #{tpu_custom_call.1} parent=1 // pred_region
      %21 = dma.done [#allocation3], 32
    $region9: #{tpu_custom_call.1} parent=1 // pred_fallthru
      _
    %v22 = vld [vmem:[#allocation2] sm:$0x3]
    %vm23 = vcmp.gt.f32.partialorder %v22, 0.8
    %v24 = vsel %vm23, 1, 0
    %v25 = vlaneseq
    %v26 = vand.u32 %v25, 127
    %v27 = vshll.u32 1, %v26
    %v28 = vmul.u32 %v24, %v27
    %vm29 = vcmask 254976
    %v30 = vsel %vm29, %v28, 0
    %v31 = vand.u32 %v30, 65535
    %v32 = vshrl.u32 %v30, 16
    %v33 = vcvt.s32.f32 %v31
    %v34 = vcvt.s32.f32 %v32
    %35 = vadd.xlane.f32.xlu0 %v33
    %v36 = vpop.xlane.xlu0 %35
    %37 = vadd.xlane.f32.xlu0 %v34
    %v38 = vpop.xlane.xlu0 %37
    %v39 = vcvt.f32.s32 %v36
    %v40 = vcvt.f32.s32 %v38
    %v41 = vshll.u32 %v40, 16
    %v42 = vadd.s32 %v41, %v39
    %vm43 = vcmask 1024
    %44 = vst.msk [vmem:[%s1] sm:$0x3] %vm43, %v42
    // Predicated region
    $region10: #{tpu_custom_call.1} parent=1 // pred_check
      _
    $region11: #{tpu_custom_call.1} parent=1 // pred_check_branch
      %46 = sbr.rel (0) target = $region13
    $region12: #{tpu_custom_call.1} parent=1 // pred_region
      _
    $region13: #{tpu_custom_call.1} parent=1 // pred_fallthru
      _
    // Predicated region
    $region14: #{tpu_custom_call.1} parent=1 // pred_check
      _
    $region15: #{tpu_custom_call.1} parent=1 // pred_check_branch
      %48 = sbr.rel (0) target = $region17
    $region16: #{tpu_custom_call.1} parent=1 // pred_region
      _
    $region17: #{tpu_custom_call.1} parent=1 // pred_fallthru
      _
    %49 = vsyncpa [#allocation3], 1

</llo_original>
